<compile_context>
chip_gen: v5e
topology: v5e:2x2
jax: 0.10.0
libtpu: 0.0.40
codegen_flags: <defaults>
</compile_context>

<pallas_src>
import functools
import math

import jax
import jax.numpy as jnp
from jax import lax
from jax.experimental import pallas as pl
from jax.experimental.pallas import tpu as pltpu


def _round_up(x, m):
    return ((x + m - 1) // m) * m


def _cdiv(a, b):
    return (a + b - 1) // b


def _sublane_multiple(dtype):
    # Native packed tile is (8,128) for 32-bit, (16,128) bf16, (32,128) int8/fp8.
    return max(8, 32 // jnp.dtype(dtype).itemsize)


def _fit_tile(dim, desired, align):
    """Divisor-aware, `align`-aligned tile: covers `dim` with < 1 tile of waste."""
    dim_a = _round_up(max(dim, 1), align)
    n_tiles = _cdiv(dim_a, max(desired, align))
    tile = _round_up(_cdiv(dim_a, n_tiles), align)
    return tile, n_tiles, tile * n_tiles


# ---------------------------------------------------------------------------
# Kernels
# ---------------------------------------------------------------------------
def _resident_kernel(a_ref, b_ref, wa_ref, wb_ref, bias_ref, o_ref):
    """Full-K blocks: out = A @ Wa + B @ Wb + bias in one grid step.

    No scratch accumulator: the two dots accumulate in f32 registers
    (preferred_element_type) and a single lane-dense store writes the tile.
    """
    acc = jnp.dot(a_ref[...], wa_ref[...], preferred_element_type=jnp.float32)
    acc = acc + jnp.dot(b_ref[...], wb_ref[...],
                        preferred_element_type=jnp.float32)
    o_ref[...] = (acc + bias_ref[...]).astype(o_ref.dtype)


def _ktiled_kernel(a_ref, b_ref, wa_ref, wb_ref, bias_ref, o_ref, acc_ref, *,
                   nka):
    """K-streamed fallback: reduction axis = [Ka blocks | Kb blocks].

    Phase A (k < nka) accumulates A @ Wa tiles, phase B accumulates B @ Wb.
    Bias is folded into the accumulator init; the idle operand's block index
    is clamped constant by the index maps so it is not re-DMA'd.
    """
    k = pl.program_id(2)

    @pl.when(k == 0)
    def _init():
        acc_ref[...] = jnp.broadcast_to(bias_ref[...], acc_ref.shape)

    @pl.when(k < nka)
    def _phase_a():
        acc_ref[...] += jnp.dot(a_ref[...], wa_ref[...],
                                preferred_element_type=jnp.float32)

    @pl.when(k >= nka)
    def _phase_b():
        acc_ref[...] += jnp.dot(b_ref[...], wb_ref[...],
                                preferred_element_type=jnp.float32)

    @pl.when(k == pl.num_programs(2) - 1)
    def _store():
        o_ref[...] = acc_ref[...].astype(o_ref.dtype)


# ---------------------------------------------------------------------------
# Wrapper
# ---------------------------------------------------------------------------
def double_linear(input_a, input_b, weight_a, weight_b, bias, *,
                  tm=512, tn=512, tk=512,
                  compute_dtype=None,
                  max_resident_bytes=40 << 20):
    """Pallas implementation of Double_Linear.forward.

    input_a: (M, in_dimA), input_b: (M, in_dimB)
    weight_a: (in_dimA, out_feature), weight_b: (in_dimB, out_feature)
    bias: (out_feature,)
    returns: (M, out_feature) = input_a @ weight_a + input_b @ weight_b + bias
    """
    M, ka = input_a.shape
    mb, kb = input_b.shape
    assert M == mb, "inputA and inputB must share the batch dimension"
    n = weight_a.shape[1]
    assert weight_a.shape[0] == ka
    assert weight_b.shape == (kb, n)
    assert bias.shape == (n,)
    assert input_a.dtype == input_b.dtype, "inputA/inputB dtypes must match"
    assert weight_a.dtype == weight_b.dtype, "weightA/weightB dtypes must match"

    out_dtype = jnp.result_type(input_a.dtype, weight_a.dtype)

    # Optional lower-precision MXU compute (f32 accumulate stays in the dot).
    if compute_dtype is not None:
        input_a = input_a.astype(compute_dtype)
        input_b = input_b.astype(compute_dtype)
        weight_a = weight_a.astype(compute_dtype)
        weight_b = weight_b.astype(compute_dtype)

    act_dtype, w_dtype = input_a.dtype, weight_a.dtype
    d_act = jnp.dtype(act_dtype).itemsize
    d_w = jnp.dtype(w_dtype).itemsize
    d_out = jnp.dtype(out_dtype).itemsize

    # --- tiling (dtype-aware sublane alignment, MXU-friendly N tiles) -------
    m_align = _sublane_multiple(act_dtype)
    n_pad128 = _round_up(n, 128)
    n_align = 256 if n_pad128 >= 256 else 128   # 2x256x256 MXU on v6e/v7x

    tm_eff, m_tiles, Mp = _fit_tile(M, tm, m_align)
    tn_eff, n_tiles, Np = _fit_tile(n, tn, n_align)

    # K is the lane dim of the activations and the sublane dim of the weights;
    # 128 alignment satisfies both for every supported dtype.
    ka_p = _round_up(ka, 128)
    kb_p = _round_up(kb, 128)

    bias_p = jnp.pad(bias.astype(jnp.float32), (0, Np - n)).reshape(1, Np)

    flops = 2 * M * (ka + kb) * n
    bytes_accessed = (d_act * M * (ka + kb) + d_w * (ka + kb) * n
                      + 4 * n + d_out * M * n)
    cost = pl.CostEstimate(flops=flops, transcendentals=0,
                           bytes_accessed=bytes_accessed)

    # Per-step VMEM for the resident path (everything double-buffered).
    resident_bytes = (2 * d_act * tm_eff * (ka_p + kb_p)      # A, B tiles
                      + 2 * d_w * (ka_p + kb_p) * tn_eff      # Wa, Wb tiles
                      + 2 * 4 * tn_eff                        # bias tile
                      + 2 * d_out * tm_eff * tn_eff)          # out tile

    if resident_bytes <= max_resident_bytes:
        # ---------------- VMEM-resident weights path ------------------------
        a_p = jnp.pad(input_a, ((0, Mp - M), (0, ka_p - ka)))
        b_p = jnp.pad(input_b, ((0, Mp - M), (0, kb_p - kb)))
        wa_p = jnp.pad(weight_a, ((0, ka_p - ka), (0, Np - n)))
        wb_p = jnp.pad(weight_b, ((0, kb_p - kb), (0, Np - n)))

        vmem_limit = int(min(max(resident_bytes * 3 // 2, 8 << 20), 48 << 20))

        # N outer / M inner: weight + bias block indices depend only on j, so
        # they stay resident across the whole inner M sweep (no re-fetch).
        out_padded = pl.pallas_call(
            _resident_kernel,
            out_shape=jax.ShapeDtypeStruct((Mp, Np), out_dtype),
            grid=(n_tiles, m_tiles),
            in_specs=[
                pl.BlockSpec((tm_eff, ka_p), lambda j, i: (i, 0)),
                pl.BlockSpec((tm_eff, kb_p), lambda j, i: (i, 0)),
                pl.BlockSpec((ka_p, tn_eff), lambda j, i: (0, j)),
                pl.BlockSpec((kb_p, tn_eff), lambda j, i: (0, j)),
                pl.BlockSpec((1, tn_eff), lambda j, i: (0, j)),
            ],
            out_specs=pl.BlockSpec((tm_eff, tn_eff), lambda j, i: (i, j)),
            compiler_params=pltpu.CompilerParams(
                dimension_semantics=("parallel", "parallel"),
                vmem_limit_bytes=vmem_limit),
            cost_estimate=cost,
        )(a_p, b_p, wa_p, wb_p, bias_p)
    else:
        # ---------------- K-streamed fallback (very large K) ----------------
        tka, nka, ka_pp = _fit_tile(ka, tk, 128)
        tkb, nkb, kb_pp = _fit_tile(kb, tk, 128)
        nk = nka + nkb

        a_p = jnp.pad(input_a, ((0, Mp - M), (0, ka_pp - ka)))
        b_p = jnp.pad(input_b, ((0, Mp - M), (0, kb_pp - kb)))
        wa_p = jnp.pad(weight_a, ((0, ka_pp - ka), (0, Np - n)))
        wb_p = jnp.pad(weight_b, ((0, kb_pp - kb), (0, Np - n)))

        # Clamp the idle operand's block index so it is not re-fetched during
        # the other phase.
        def a_map(j, i, k):
            return (i, jnp.minimum(k, nka - 1))

        def wa_map(j, i, k):
            return (jnp.minimum(k, nka - 1), j)

        def b_map(j, i, k):
            return (i, jnp.maximum(k - nka, 0))

        def wb_map(j, i, k):
            return (jnp.maximum(k - nka, 0), j)

        ktiled_bytes = (2 * d_act * tm_eff * (tka + tkb)
                        + 2 * d_w * (tka + tkb) * tn_eff
                        + 2 * 4 * tn_eff
                        + 2 * d_out * tm_eff * tn_eff
                        + 4 * tm_eff * tn_eff)                 # f32 accumulator
        vmem_limit = int(min(max(ktiled_bytes * 3 // 2, 8 << 20), 48 << 20))

        out_padded = pl.pallas_call(
            functools.partial(_ktiled_kernel, nka=nka),
            out_shape=jax.ShapeDtypeStruct((Mp, Np), out_dtype),
            grid=(n_tiles, m_tiles, nk),
            in_specs=[
                pl.BlockSpec((tm_eff, tka), a_map),
                pl.BlockSpec((tm_eff, tkb), b_map),
                pl.BlockSpec((tka, tn_eff), wa_map),
                pl.BlockSpec((tkb, tn_eff), wb_map),
                pl.BlockSpec((1, tn_eff), lambda j, i, k: (0, j)),
            ],
            out_specs=pl.BlockSpec((tm_eff, tn_eff), lambda j, i, k: (i, j)),
            scratch_shapes=[pltpu.VMEM((tm_eff, tn_eff), jnp.float32)],
            compiler_params=pltpu.CompilerParams(
                dimension_semantics=("parallel", "parallel", "arbitrary"),
                vmem_limit_bytes=vmem_limit),
            cost_estimate=cost,
        )(a_p, b_p, wa_p, wb_p, bias_p)

    return out_padded[:M, :n]


# ---------------------------------------------------------------------------
# Parameter init mirroring Double_Linear.reset_parameters(), and a reference.
# ---------------------------------------------------------------------------
def init_double_linear_params(key, in_dim_a, in_dim_b, out_feature):
    k_a, k_b, k_bias = jax.random.split(key, 3)
    stdv_a = 1.0 / math.sqrt(out_feature)   # weightA.size(1) == out_feature
    stdv_b = 1.0 / math.sqrt(out_feature)   # weightB.size(1) == out_feature
    weight_a = jax.random.uniform(k_a, (in_dim_a, out_feature),
                                  jnp.float32, -stdv_a, stdv_a)
    weight_b = jax.random.uniform(k_b, (in_dim_b, out_feature),
                                  jnp.float32, -stdv_b, stdv_b)
    bias = jax.random.uniform(k_bias, (out_feature,),
                              jnp.float32, -stdv_b, stdv_b)
    return weight_a, weight_b, bias


def _reference(input_a, input_b, weight_a, weight_b, bias):
    hi = lax.Precision.HIGHEST
    return (jnp.dot(input_a, weight_a, precision=hi)
            + jnp.dot(input_b, weight_b, precision=hi) + bias)


if __name__ == "__main__":
    key = jax.random.PRNGKey(0)

    def run_case(key, M, ka, kb, n, **kw):
        kp, kxa, kxb, key = jax.random.split(key, 4)
        wa, wb, b = init_double_linear_params(kp, ka, kb, n)
        xa = jax.random.normal(kxa, (M, ka), jnp.float32)
        xb = jax.random.normal(kxb, (M, kb), jnp.float32)
        out = jax.block_until_ready(double_linear(xa, xb, wa, wb, b, **kw))
        ref = _reference(xa, xb, wa, wb, b)
        return key, out, ref

    # 1) small, module-consistent shapes -> single-block VMEM-resident path
    key, out, ref = run_case(key, 8, 32, 16, 64)
    assert out.shape == (8, 64)
    assert jnp.allclose(out, ref, atol=1e-4, rtol=1e-4)

    # 2) exercise the tiled (N-outer, M-inner) resident grid
    key, out, ref = run_case(key, 256, 160, 96, 512, tm=128, tn=128)
    assert out.shape == (256, 512)
    assert jnp.allclose(out, ref, atol=1e-4, rtol=1e-4)

    # 3) force the K-streamed fallback (two reduction phases + f32 accumulator)
    key, out, ref = run_case(key, 64, 160, 96, 128, tm=64, tn=128, tk=128,
                             max_resident_bytes=0)
    assert out.shape == (64, 128)
    assert jnp.allclose(out, ref, atol=1e-4, rtol=1e-4)

    # 4) bf16 MXU compute with f32 accumulation (looser tolerance)
    key, out, ref = run_case(key, 64, 128, 64, 128,
                             compute_dtype=jnp.bfloat16)
    assert out.shape == (64, 128)
    assert jnp.allclose(out, ref, atol=5e-2, rtol=5e-2)

    print("KERNEL_OK")
</pallas_src>

<mosaic_0001>
module attributes {stable_mosaic.version = 11 : i64} {
  func.func @_resident_kernel(%arg0: i32, %arg1: i32, %arg2: memref<8x128xf32, #tpu.memory_space<vmem>>, %arg3: memref<8x128xf32, #tpu.memory_space<vmem>>, %arg4: memref<128x128xf32, #tpu.memory_space<vmem>>, %arg5: memref<128x128xf32, #tpu.memory_space<vmem>>, %arg6: memref<1x128xf32, #tpu.memory_space<vmem>>, %arg7: memref<8x128xf32, #tpu.memory_space<vmem>>) attributes {dimension_semantics = [#tpu.dimension_semantics<parallel>, #tpu.dimension_semantics<parallel>], iteration_bounds = array<i64: 1, 1>, scalar_prefetch = 0 : i64, scratch_operands = 0 : i64, tpu.core_type = #tpu.core_type<tc>, window_params = [{transform_indices = @transform_0, window_bounds = array<i64: 8, 128>}, {transform_indices = @transform_1, window_bounds = array<i64: 8, 128>}, {transform_indices = @transform_2, window_bounds = array<i64: 128, 128>}, {transform_indices = @transform_3, window_bounds = array<i64: 128, 128>}, {transform_indices = @transform_4, window_bounds = array<i64: 1, 128>}, {transform_indices = @transform_5, window_bounds = array<i64: 8, 128>}]} {
    %c0 = arith.constant 0 : index
    %c0_0 = arith.constant 0 : index
    %0 = vector.load %arg2[%c0, %c0_0] : memref<8x128xf32, #tpu.memory_space<vmem>>, vector<8x128xf32>
    %c0_1 = arith.constant 0 : index
    %c0_2 = arith.constant 0 : index
    %1 = vector.load %arg4[%c0_1, %c0_2] : memref<128x128xf32, #tpu.memory_space<vmem>>, vector<128x128xf32>
    %cst = arith.constant dense<0.000000e+00> : vector<8x128xf32>
    %2 = tpu.matmul %0, %1, %cst {dimension_numbers = #tpu.dot_dimension_numbers<[1], [0], [0], [1], [0, 0, 1, 1], [], []>} : vector<8x128xf32>, vector<128x128xf32>, vector<8x128xf32> -> vector<8x128xf32>
    %c0_3 = arith.constant 0 : index
    %c0_4 = arith.constant 0 : index
    %3 = vector.load %arg3[%c0_3, %c0_4] : memref<8x128xf32, #tpu.memory_space<vmem>>, vector<8x128xf32>
    %c0_5 = arith.constant 0 : index
    %c0_6 = arith.constant 0 : index
    %4 = vector.load %arg5[%c0_5, %c0_6] : memref<128x128xf32, #tpu.memory_space<vmem>>, vector<128x128xf32>
    %cst_7 = arith.constant dense<0.000000e+00> : vector<8x128xf32>
    %5 = tpu.matmul %3, %4, %cst_7 {dimension_numbers = #tpu.dot_dimension_numbers<[1], [0], [0], [1], [0, 0, 1, 1], [], []>} : vector<8x128xf32>, vector<128x128xf32>, vector<8x128xf32> -> vector<8x128xf32>
    %6 = arith.addf %2, %5 : vector<8x128xf32>
    %c0_8 = arith.constant 0 : index
    %c0_9 = arith.constant 0 : index
    %7 = vector.load %arg6[%c0_8, %c0_9] : memref<1x128xf32, #tpu.memory_space<vmem>>, vector<1x128xf32>
    %8 = vector.broadcast %7 : vector<1x128xf32> to vector<8x128xf32>
    %9 = arith.addf %6, %8 : vector<8x128xf32>
    %c0_10 = arith.constant 0 : index
    %c0_11 = arith.constant 0 : index
    %10 = vector.load %arg7[%c0_10, %c0_11] : memref<8x128xf32, #tpu.memory_space<vmem>>, vector<8x128xf32>
    tpu.vector_store %arg7[%c0_10, %c0_11], %9 {strides = array<i32>} : memref<8x128xf32, #tpu.memory_space<vmem>>, vector<8x128xf32>,
    return
  }
  func.func @transform_0(%arg0: i32, %arg1: i32) -> (i32, i32) {
    %c0_i32 = arith.constant 0 : i32
    %c0_i32_0 = arith.constant 0 : i32
    return %arg1, %c0_i32 : i32, i32
  }
  func.func @transform_1(%arg0: i32, %arg1: i32) -> (i32, i32) {
    %c0_i32 = arith.constant 0 : i32
    %c0_i32_0 = arith.constant 0 : i32
    return %arg1, %c0_i32 : i32, i32
  }
  func.func @transform_2(%arg0: i32, %arg1: i32) -> (i32, i32) {
    %c0_i32 = arith.constant 0 : i32
    %c0_i32_0 = arith.constant 0 : i32
    return %c0_i32, %arg0 : i32, i32
  }
  func.func @transform_3(%arg0: i32, %arg1: i32) -> (i32, i32) {
    %c0_i32 = arith.constant 0 : i32
    %c0_i32_0 = arith.constant 0 : i32
    return %c0_i32, %arg0 : i32, i32
  }
  func.func @transform_4(%arg0: i32, %arg1: i32) -> (i32, i32) {
    %c0_i32 = arith.constant 0 : i32
    %c0_i32_0 = arith.constant 0 : i32
    return %c0_i32, %arg0 : i32, i32
  }
  func.func @transform_5(%arg0: i32, %arg1: i32) -> (i32, i32) {
    %c0_i32 = arith.constant 0 : i32
    return %arg1, %arg0 : i32, i32
  }
}

</mosaic_0001>

<llo_original>
// kernel: tpu_custom_call.1
$region0: #{tpu_custom_call.1}
  #allocation0 [shape = 'u32[]', space=smem, size = 0x4, offset = 0x4, fixed_abs, tag = 'smem constant byte address 0x4 - core index']
  #allocation1 [shape = 'u32[72,128]{1,0:T(1,128)}', space=vmem, size = 0x9000, scoped, tag = 'internal scratch']
  %s0 = inlined_call_operand.hbm [shape: f32[8,128], index: 0, kind: input, shape index: {}]
  %s1 = inlined_call_operand.hbm [shape: f32[8,128], index: 1, kind: input, shape index: {}]
  %s2 = inlined_call_operand.hbm [shape: f32[128,128], index: 2, kind: input, shape index: {}]
  %s3 = inlined_call_operand.hbm [shape: f32[128,128], index: 3, kind: input, shape index: {}]
  %s4 = inlined_call_operand.vmem [shape: f32[1,128], index: 4, kind: input, shape index: {}]
  %s5 = inlined_call_operand.hbm [shape: f32[8,128], index: 5, kind: output, shape index: {}]
  %s6 = sld [smem:[#allocation0]]
  $region46: #{tpu_custom_call.1} parent=0
    _
  %s8 = ssub.s32 1, %s6
  %s9 = scalar_select 0, %s8, %s6
  $region1: #{tpu_custom_call.1} parent=0
    #allocation2 [shape = 'u8[4096]{0}', space=vmem, size = 0x1000, scoped, tag = 'input window, operand 0, single buffered']
    #allocation3 [shape = 's32[1]{0}', space=sflag, size = 0x4, scoped, tag = 'scoped memory for tpu_custom_call.1']
    #allocation4 [shape = 's32[1]{0}', space=sflag, size = 0x4, scoped, tag = 'scoped memory for tpu_custom_call.1']
    #allocation5 [shape = 'u8[4096]{0}', space=vmem, size = 0x1000, scoped, tag = 'input window, operand 1, single buffered']
    #allocation6 [shape = 's32[1]{0}', space=sflag, size = 0x4, scoped, tag = 'scoped memory for tpu_custom_call.1']
    #allocation7 [shape = 'u8[65536]{0}', space=vmem, size = 0x10000, scoped, tag = 'input window, operand 2, single buffered']
    #allocation8 [shape = 'u8[65536]{0}', space=vmem, size = 0x10000, scoped, tag = 'input window, operand 3, single buffered']
    #allocation9 [shape = 's32[1]{0}', space=sflag, size = 0x4, scoped, tag = 'scoped memory for tpu_custom_call.1']
    #allocation10 [shape = 'u8[4096]{0}', space=vmem, size = 0x1000, scoped, tag = 'output window, operand 0, single buffered']
    %10 = vsyncpa [#allocation3], 0
    %11 = vsyncpa [#allocation6], 0
    %12 = vsyncpa [#allocation9], 0
    %13 = vsyncpa [#allocation4], 0
    // Predicated region
    $region2: #{tpu_custom_call.1} parent=1 // pred_check
      _
    $region3: #{tpu_custom_call.1} parent=1 // pred_check_branch
      %15 = sbr.rel (0) target = $region5
    $region4: #{tpu_custom_call.1} parent=1 // pred_region
      %17 = vsyncadd [#allocation3], 0
      %s19 = sshll.u32 %s0, 4
      %s20 = int_to_ptr.hbm [resolvable:$true] %s19
      %s21 = sshll.u32 [#allocation2], 4
      %s22 = int_to_ptr.vmem [resolvable:$true] %s21
      %24 = dma.hbm_to_vmem [thread:$0]  %s20, 128, %s22, [#allocation3]
    $region5: #{tpu_custom_call.1} parent=1 // pred_fallthru
      _
    // Predicated region
    $region6: #{tpu_custom_call.1} parent=1 // pred_check
      _
    $region7: #{tpu_custom_call.1} parent=1 // pred_check_branch
      %26 = sbr.rel (0) target = $region9
    $region8: #{tpu_custom_call.1} parent=1 // pred_region
      %28 = vsyncadd [#allocation6], 0
      %s30 = sshll.u32 %s1, 4
      %s31 = int_to_ptr.hbm [resolvable:$true] %s30
      %s32 = sshll.u32 [#allocation5], 4
      %s33 = int_to_ptr.vmem [resolvable:$true] %s32
      %35 = dma.hbm_to_vmem [thread:$0]  %s31, 128, %s33, [#allocation6]
    $region9: #{tpu_custom_call.1} parent=1 // pred_fallthru
      _
    // Predicated region
    $region10: #{tpu_custom_call.1} parent=1 // pred_check
      _
    $region11: #{tpu_custom_call.1} parent=1 // pred_check_branch
      %37 = sbr.rel (0) target = $region13
    $region12: #{tpu_custom_call.1} parent=1 // pred_region
      %39 = vsyncadd [#allocation6], 0
      %s40 = sshll.u32 %s2, 4
      %s41 = int_to_ptr.hbm [resolvable:$true] %s40
      %s42 = sshll.u32 [#allocation7], 4
      %s43 = int_to_ptr.vmem [resolvable:$true] %s42
      %48 = dma.hbm_to_vmem [thread:$0]  %s41, 2048, %s43, [#allocation6], 128, 128, 8
    $region13: #{tpu_custom_call.1} parent=1 // pred_fallthru
      _
    // Predicated region
    $region14: #{tpu_custom_call.1} parent=1 // pred_check
      _
    $region15: #{tpu_custom_call.1} parent=1 // pred_check_branch
      %50 = sbr.rel (0) target = $region17
    $region16: #{tpu_custom_call.1} parent=1 // pred_region
      %52 = vsyncadd [#allocation9], 0
      %s53 = sshll.u32 %s3, 4
      %s54 = int_to_ptr.hbm [resolvable:$true] %s53
      %s55 = sshll.u32 [#allocation8], 4
      %s56 = int_to_ptr.vmem [resolvable:$true] %s55
      %61 = dma.hbm_to_vmem [thread:$0]  %s54, 2048, %s56, [#allocation9], 128, 128, 8
    $region17: #{tpu_custom_call.1} parent=1 // pred_fallthru
      _
    // Predicated region
    $region18: #{tpu_custom_call.1} parent=1 // pred_check
      _
    $region19: #{tpu_custom_call.1} parent=1 // pred_check_branch
      %63 = sbr.rel (0) target = $region21
    $region20: #{tpu_custom_call.1} parent=1 // pred_region
      _
    $region21: #{tpu_custom_call.1} parent=1 // pred_fallthru
      _
    // Predicated region
    $region22: #{tpu_custom_call.1} parent=1 // pred_check
      _
    $region23: #{tpu_custom_call.1} parent=1 // pred_check_branch
      %65 = sbr.rel (0) target = $region25
    $region24: #{tpu_custom_call.1} parent=1 // pred_region
      %67 = dma.done [#allocation3], 128
    $region25: #{tpu_custom_call.1} parent=1 // pred_fallthru
      _
    // Predicated region
    $region26: #{tpu_custom_call.1} parent=1 // pred_check
      _
    $region27: #{tpu_custom_call.1} parent=1 // pred_check_branch
      %69 = sbr.rel (0) target = $region29
    $region28: #{tpu_custom_call.1} parent=1 // pred_region
      %71 = dma.done [#allocation6], 128
    $region29: #{tpu_custom_call.1} parent=1 // pred_fallthru
      _
    // Predicated region
    $region30: #{tpu_custom_call.1} parent=1 // pred_check
      _
    $region31: #{tpu_custom_call.1} parent=1 // pred_check_branch
      %73 = sbr.rel (0) target = $region33
    $region32: #{tpu_custom_call.1} parent=1 // pred_region
      %75 = dma.done [#allocation6], 2048
    $region33: #{tpu_custom_call.1} parent=1 // pred_fallthru
      _
    // Predicated region
    $region34: #{tpu_custom_call.1} parent=1 // pred_check
      _
    $region35: #{tpu_custom_call.1} parent=1 // pred_check_branch
      %77 = sbr.rel (0) target = $region37
    $region36: #{tpu_custom_call.1} parent=1 // pred_region
      %79 = dma.done [#allocation9], 2048
    $region37: #{tpu_custom_call.1} parent=1 // pred_fallthru
      _
    %v80 = vld [vmem:[#allocation2] sm:$0xff]
    %v81 = vld [vmem:[#allocation7] sm:$0xff]
    %v82 = vld [vmem:[#allocation7 + $0x8] sm:$0xff]
    %v83 = vld [vmem:[#allocation7 + $0x10] sm:$0xff]
    %v84 = vld [vmem:[#allocation7 + $0x18] sm:$0xff]
    %v85 = vld [vmem:[#allocation7 + $0x20] sm:$0xff]
    %v86 = vld [vmem:[#allocation7 + $0x28] sm:$0xff]
    %v87 = vld [vmem:[#allocation7 + $0x30] sm:$0xff]
    %v88 = vld [vmem:[#allocation7 + $0x38] sm:$0xff]
    %v89 = vld [vmem:[#allocation7 + $0x40] sm:$0xff]
    %v90 = vld [vmem:[#allocation7 + $0x48] sm:$0xff]
    %v91 = vld [vmem:[#allocation7 + $0x50] sm:$0xff]
    %v92 = vld [vmem:[#allocation7 + $0x58] sm:$0xff]
    %v93 = vld [vmem:[#allocation7 + $0x60] sm:$0xff]
    %v94 = vld [vmem:[#allocation7 + $0x68] sm:$0xff]
    %v95 = vld [vmem:[#allocation7 + $0x70] sm:$0xff]
    %v96 = vld [vmem:[#allocation7 + $0x78] sm:$0xff]
    %v97 = vld [vmem:[#allocation5] sm:$0xff]
    %v98 = vld [vmem:[#allocation8] sm:$0xff]
    %v99 = vld [vmem:[#allocation8 + $0x8] sm:$0xff]
    %v100 = vld [vmem:[#allocation8 + $0x10] sm:$0xff]
    %v101 = vld [vmem:[#allocation8 + $0x18] sm:$0xff]
    %v102 = vld [vmem:[#allocation8 + $0x20] sm:$0xff]
    %v103 = vld [vmem:[#allocation8 + $0x28] sm:$0xff]
    %v104 = vld [vmem:[#allocation8 + $0x30] sm:$0xff]
    %v105 = vld [vmem:[#allocation8 + $0x38] sm:$0xff]
    %v106 = vld [vmem:[#allocation8 + $0x40] sm:$0xff]
    %v107 = vld [vmem:[#allocation8 + $0x48] sm:$0xff]
    %v108 = vld [vmem:[#allocation8 + $0x50] sm:$0xff]
    %v109 = vld [vmem:[#allocation8 + $0x58] sm:$0xff]
    %v110 = vld [vmem:[#allocation8 + $0x60] sm:$0xff]
    %v111 = vld [vmem:[#allocation8 + $0x68] sm:$0xff]
    %v112 = vld [vmem:[#allocation8 + $0x70] sm:$0xff]
    %v113 = vld [vmem:[#allocation8 + $0x78] sm:$0xff]
    %114 = vmatpush.msra.mxu0 %v113
    %115 = vmatpush.msra.mxu0 %v112
    %116 = vmatpush.msra.mxu0 %v111
    %117 = vmatpush.msra.mxu0 %v110
    %118 = vmatpush.msra.mxu0 %v109
    %119 = vmatpush.msra.mxu0 %v108
    %120 = vmatpush.msra.mxu0 %v107
    %121 = vmatpush.msra.mxu0 %v106
    %122 = vmatpush.msra.mxu0 %v105
    %123 = vmatpush.msra.mxu0 %v104
    %124 = vmatpush.msra.mxu0 %v103
    %125 = vmatpush.msra.mxu0 %v102
    %126 = vmatpush.msra.mxu0 %v101
    %127 = vmatpush.msra.mxu0 %v100
    %128 = vmatpush.msra.mxu0 %v99
    %129 = vmatpush.msra.mxu0 %v98
    %130 = vmatmul.f32.gmra.mxu0 %v97
    %v131 = vpop.f32.mrf.mxu0
    %v132 = vadd.f32 0.0, %v131
    %133 = vdwg.mxu0
    %134 = vmatpush.msra.mxu0 %v96
    %135 = vmatpush.msra.mxu0 %v95
    %136 = vmatpush.msra.mxu0 %v94
    %137 = vmatpush.msra.mxu0 %v93
    %138 = vmatpush.msra.mxu0 %v92
    %139 = vmatpush.msra.mxu0 %v91
    %140 = vmatpush.msra.mxu0 %v90
    %141 = vmatpush.msra.mxu0 %v89
    %142 = vmatpush.msra.mxu0 %v88
    %143 = vmatpush.msra.mxu0 %v87
    %144 = vmatpush.msra.mxu0 %v86
    %145 = vmatpush.msra.mxu0 %v85
    %146 = vmatpush.msra.mxu0 %v84
    %147 = vmatpush.msra.mxu0 %v83
    %148 = vmatpush.msra.mxu0 %v82
    %149 = vmatpush.msra.mxu0 %v81
    %150 = vmatmul.f32.gmra.mxu0 %v80
    %v151 = vpop.f32.mrf.mxu0
    %v152 = vadd.f32 %v132, %v151
    %153 = vdwg.mxu0
    %v154 = vld [vmem:[%s4] sm:$0x1]
    %v156 = vperm.slane %v154, 0
    %v158 = vadd.f32 %v152, %v156
    %159 = vst [vmem:[#allocation10] sm:$0xff] %v158
    // Predicated region
    $region38: #{tpu_custom_call.1} parent=1 // pred_check
      _
    $region39: #{tpu_custom_call.1} parent=1 // pred_check_branch
      %161 = sbr.rel (0) target = $region41
    $region40: #{tpu_custom_call.1} parent=1 // pred_region
      %163 = vsyncadd [#allocation4], 0
      %s165 = sshll.u32 [#allocation10], 4
      %s166 = int_to_ptr.vmem [resolvable:$true] %s165
      %s167 = sshll.u32 %s5, 4
      %s168 = int_to_ptr.hbm [resolvable:$true] %s167
      %170 = dma.vmem_to_hbm [thread:$0]  %s166, 128, %s168, [#allocation4]
    $region41: #{tpu_custom_call.1} parent=1 // pred_fallthru
      _
    // Predicated region
    $region42: #{tpu_custom_call.1} parent=1 // pred_check
      _
    $region43: #{tpu_custom_call.1} parent=1 // pred_check_branch
      %172 = sbr.rel (0) target = $region45
    $region44: #{tpu_custom_call.1} parent=1 // pred_region
      %174 = dma.done [#allocation4], 128
    $region45: #{tpu_custom_call.1} parent=1 // pred_fallthru
      _
    %175 = vsyncpa [#allocation3], 1
    %176 = vsyncpa [#allocation6], 1
    %177 = vsyncpa [#allocation9], 1
    %178 = vsyncpa [#allocation4], 1

</llo_original>
